<compile_context>
chip_gen: v6e
topology: v6e:2x2x1
jax: 0.10.0
libtpu: 0.0.40
codegen_flags: <defaults>
</compile_context>

<pallas_src>
import jax
import jax.numpy as jnp
from jax.experimental import pallas as pl
from jax.experimental.pallas import tpu as pltpu


# -----------------------------------------------------------------------------
# Pallas kernel: fused "valid" stride-1 conv (KH x KW) + folded-BN affine + ReLU
# for one (batch, output-row-strip, Cout-tile) grid cell.
#
# Per step it does KH*KW MXU matmuls of shape (TH*Wout, Cin) x (Cin, CT) with a
# small fp32 accumulator, then fuses the BatchNorm scale/bias and ReLU before
# writing one lane-dense (TH, Wout, CT) output block.
# -----------------------------------------------------------------------------
def _conv_bn_relu_kernel(x_ref, w_ref, scale_ref, bias_ref, o_ref):
    _, th, wout, ct = o_ref.shape          # output block: (1, TH, Wout, CT)
    kh_n, kw_n, cin, _ = w_ref.shape       # weight block: (KH, KW, Cin, CT)

    # First padded-input row needed by this output row strip.
    row0 = pl.multiple_of(pl.program_id(1) * th, th)

    acc = jnp.zeros((th * wout, ct), jnp.float32)
    for kh in range(kh_n):
        for kw in range(kw_n):
            patch = x_ref[0, pl.ds(row0 + kh, th), pl.ds(kw, wout), :]  # (TH, Wout, Cin) bf16
            acc = acc + jnp.dot(
                patch.reshape(th * wout, cin),
                w_ref[kh, kw],
                preferred_element_type=jnp.float32,
            )

    y = acc * scale_ref[...] + bias_ref[...]          # folded BN (eval mode), f32
    y = jnp.maximum(y, 0.0)                           # ReLU, f32
    o_ref[0] = y.reshape(th, wout, ct).astype(o_ref.dtype)


def _pick_row_tile(hout, wout, target_rows=128):
    """Largest divisor TH of hout with TH*Wout <= target (keeps acc in vregs)."""
    best = 1
    for th in range(1, hout + 1):
        if hout % th == 0 and th * wout <= max(target_rows, wout):
            best = th
    return best


def conv_bn_relu(x, w, scale, bias):
    """Fused valid stride-1 conv + BN + ReLU.

    x:     (N, Hp, Wp, Cin)  NHWC, already padded, bf16
    w:     (KH, KW, Cin, Cout) bf16
    scale: (1, Cout) f32   bias: (1, Cout) f32
    returns (N, Hout, Wout, Cout) bf16
    """
    n, hp, wp, cin = x.shape
    kh, kw, wcin, cout = w.shape
    assert wcin == cin
    hout, wout = hp - kh + 1, wp - kw + 1

    th = _pick_row_tile(hout, wout)          # output-row strip height
    ct = min(cout, 128)                      # lane-dense Cout tile
    assert cout % ct == 0

    grid = (n, hout // th, cout // ct)

    return pl.pallas_call(
        _conv_bn_relu_kernel,
        out_shape=jax.ShapeDtypeStruct((n, hout, wout, cout), jnp.bfloat16),
        grid=grid,
        in_specs=[
            # Whole padded image per batch element; its block index only changes
            # with the batch axis, so it is DMA'd once per image and revisited
            # across the (strip, cout) axes.
            # TODO(synk): for very large images switch to strip+halo input blocks
            # (Element-indexed H or a manual double-buffered DMA) to cut the VMEM
            # footprint and fold the per-layer padding into the kernel.
            pl.BlockSpec((1, hp, wp, cin), lambda b, h, c: (b, 0, 0, 0)),
            pl.BlockSpec((kh, kw, cin, ct), lambda b, h, c: (0, 0, 0, c)),
            pl.BlockSpec((1, ct), lambda b, h, c: (0, c)),
            pl.BlockSpec((1, ct), lambda b, h, c: (0, c)),
        ],
        out_specs=pl.BlockSpec((1, th, wout, ct), lambda b, h, c: (b, h, 0, c)),
        compiler_params=pltpu.CompilerParams(
            dimension_semantics=("parallel", "parallel", "parallel"),
            vmem_limit_bytes=32 * 1024 * 1024,
        ),
    )(x, w, scale, bias)


# -----------------------------------------------------------------------------
# Stride-2 handling: rewrite the stride-2 3x3 pad-1 conv as a stride-1 2x2
# "valid" conv over a space-to-depth rearranged input (4 parity sub-images on
# the channel axis).  The weight rearrangement is done ONCE at init time; the
# input rearrangement is pure index shuffling in JAX.
# -----------------------------------------------------------------------------
def _space_to_depth_weights(w):
    kh_n, kw_n, cin, cout = w.shape  # 3, 3
    w2 = jnp.zeros((2, 2, 4 * cin, cout), w.dtype)
    for a in range(2):
        for b in range(2):
            for p in range(2):
                for q in range(2):
                    kh, kw = 2 * a + p, 2 * b + q
                    if kh < kh_n and kw < kw_n:
                        blk = p * 2 + q
                        w2 = w2.at[a, b, blk * cin:(blk + 1) * cin, :].set(w[kh, kw])
    return w2


def _space_to_depth_input(x):
    # (N, H, W, C) -> pad -> (N, H/2+1, W/2+1, 4C); requires even H, W.
    xp = jnp.pad(x, ((0, 0), (1, 1), (1, 1), (0, 0)))
    subs = [xp[:, p::2, q::2, :] for p in (0, 1) for q in (0, 1)]
    return jnp.concatenate(subs, axis=-1)


# -----------------------------------------------------------------------------
# Parameter init (deterministic, synthetic, eval-mode BN folded) and forward.
# -----------------------------------------------------------------------------
def init_vgg_stage_params(key, in_ch, stage_ch, num_block, kernel_size=3):
    params = []
    eps = 1e-5
    for blk in range(num_block):
        cin = in_ch if blk == 0 else stage_ch
        stride = 2 if blk == 0 else 1
        key, kw_, kg, kb, km, kv = jax.random.split(key, 6)
        w = jax.random.normal(kw_, (kernel_size, kernel_size, cin, stage_ch),
                              jnp.float32) / jnp.sqrt(kernel_size * kernel_size * cin)
        gamma = 1.0 + 0.1 * jax.random.normal(kg, (stage_ch,), jnp.float32)
        beta = 0.1 * jax.random.normal(kb, (stage_ch,), jnp.float32)
        mean = 0.1 * jax.random.normal(km, (stage_ch,), jnp.float32)
        var = jnp.abs(jax.random.normal(kv, (stage_ch,), jnp.float32)) + 0.5
        scale = gamma / jnp.sqrt(var + eps)          # fold eval-mode BN into affine
        bias = beta - mean * scale

        w_kernel = _space_to_depth_weights(w) if stride == 2 else w
        params.append(dict(
            stride=stride,
            w_raw=w,                                     # kept for the reference path
            w_kernel=w_kernel.astype(jnp.bfloat16),      # kernel-ready weights
            scale=scale.reshape(1, stage_ch),            # (1, Cout) f32
            bias=bias.reshape(1, stage_ch),              # (1, Cout) f32
        ))
    return params


def vgg_stage_forward(x_nchw, params):
    x = jnp.transpose(x_nchw, (0, 2, 3, 1)).astype(jnp.bfloat16)  # NCHW -> NHWC bf16
    for p in params:
        if p["stride"] == 2:
            # TODO(synk): fold the space-to-depth + per-layer pad into the kernel
            # (strided/Element input reads) to avoid this extra HBM pass.
            x = _space_to_depth_input(x)
        else:
            x = jnp.pad(x, ((0, 0), (1, 1), (1, 1), (0, 0)))
        x = conv_bn_relu(x, p["w_kernel"], p["scale"], p["bias"])
    return jnp.transpose(x, (0, 3, 1, 2))  # NHWC -> NCHW (match PyTorch output)


def vgg_stage_reference(x_nchw, params):
    # Same numerics policy as the kernel path: bf16 conv operands, f32 accumulate,
    # f32 BN/ReLU, bf16 activations between layers.
    x = x_nchw.astype(jnp.bfloat16)
    for p in params:
        w_oihw = jnp.transpose(p["w_raw"], (3, 2, 0, 1)).astype(jnp.bfloat16)
        y = jax.lax.conv_general_dilated(
            x, w_oihw, window_strides=(p["stride"], p["stride"]),
            padding=((1, 1), (1, 1)),
            dimension_numbers=("NCHW", "OIHW", "NCHW"),
            preferred_element_type=jnp.float32)
        y = y * p["scale"].reshape(1, -1, 1, 1) + p["bias"].reshape(1, -1, 1, 1)
        x = jnp.maximum(y, 0.0).astype(jnp.bfloat16)
    return x


if __name__ == "__main__":
    in_ch, stage_ch, num_block = 4, 8, 2
    batch, spatial = 2, 32  # spatial=32 so the output is split into multiple row strips

    key = jax.random.PRNGKey(0)
    kx, kp = jax.random.split(key)
    x = jax.random.normal(kx, (batch, in_ch, spatial, spatial), jnp.float32)
    params = init_vgg_stage_params(kp, in_ch, stage_ch, num_block)

    out = jax.block_until_ready(vgg_stage_forward(x, params))
    ref = jax.block_until_ready(vgg_stage_reference(x, params))

    assert out.shape == (batch, stage_ch, spatial // 2, spatial // 2), out.shape
    out_f = out.astype(jnp.float32)
    ref_f = ref.astype(jnp.float32)
    max_err = float(jnp.max(jnp.abs(out_f - ref_f)))
    tol = 5e-2 * (1.0 + float(jnp.max(jnp.abs(ref_f))))   # bf16-aware tolerance
    assert max_err < tol, f"mismatch vs reference: {max_err} (tol {tol})"

    print("KERNEL_OK")
</pallas_src>

<mosaic_0001>
module attributes {stable_mosaic.version = 11 : i64} {
  func.func @_conv_bn_relu_kernel(%arg0: i32, %arg1: i32, %arg2: i32, %arg3: memref<1x17x17x16xbf16, #tpu.memory_space<vmem>>, %arg4: memref<2x2x16x8xbf16, #tpu.memory_space<vmem>>, %arg5: memref<1x8xf32, #tpu.memory_space<vmem>>, %arg6: memref<1x8xf32, #tpu.memory_space<vmem>>, %arg7: memref<1x8x16x8xbf16, #tpu.memory_space<vmem>>) attributes {dimension_semantics = [#tpu.dimension_semantics<parallel>, #tpu.dimension_semantics<parallel>, #tpu.dimension_semantics<parallel>], iteration_bounds = array<i64: 2, 2, 1>, scalar_prefetch = 0 : i64, scratch_operands = 0 : i64, tpu.core_type = #tpu.core_type<tc>, window_params = [{transform_indices = @transform_0, window_bounds = array<i64: 1, 17, 17, 16>}, {transform_indices = @transform_1, window_bounds = array<i64: 2, 2, 16, 8>}, {transform_indices = @transform_2, window_bounds = array<i64: 1, 8>}, {transform_indices = @transform_3, window_bounds = array<i64: 1, 8>}, {transform_indices = @transform_4, window_bounds = array<i64: 1, 8, 16, 8>}]} {
    %c8_i32 = arith.constant 8 : i32
    %0 = arith.muli %arg1, %c8_i32 : i32
    %1 = tpu.assume_multiple %0, 8 : i32
    %cst = arith.constant 0.000000e+00 : f32
    %2 = vector.broadcast %cst : f32 to vector<128x8xf32>
    %c0_i32 = arith.constant 0 : i32
    %3 = arith.addi %1, %c0_i32 : i32
    %c0 = arith.constant 0 : index
    %4 = arith.index_cast %3 : i32 to index
    %c0_0 = arith.constant 0 : index
    %c0_1 = arith.constant 0 : index
    %5 = vector.load %arg3[%c0, %4, %c0_0, %c0_1] : memref<1x17x17x16xbf16, #tpu.memory_space<vmem>>, vector<1x8x16x16xbf16>
    %6 = vector.shape_cast %5 : vector<1x8x16x16xbf16> to vector<8x16x16xbf16>
    %7 = vector.shape_cast %6 : vector<8x16x16xbf16> to vector<128x16xbf16>
    %c0_2 = arith.constant 0 : index
    %c0_3 = arith.constant 0 : index
    %c0_4 = arith.constant 0 : index
    %c0_5 = arith.constant 0 : index
    %8 = vector.load %arg4[%c0_2, %c0_3, %c0_4, %c0_5] : memref<2x2x16x8xbf16, #tpu.memory_space<vmem>>, vector<1x1x16x8xbf16>
    %9 = vector.shape_cast %8 : vector<1x1x16x8xbf16> to vector<16x8xbf16>
    %cst_6 = arith.constant dense<0.000000e+00> : vector<128x8xf32>
    %10 = tpu.matmul %7, %9, %cst_6 {dimension_numbers = #tpu.dot_dimension_numbers<[1], [0], [0], [1], [0, 0, 1, 1], [], []>} : vector<128x16xbf16>, vector<16x8xbf16>, vector<128x8xf32> -> vector<128x8xf32>
    %11 = arith.addf %2, %10 : vector<128x8xf32>
    %c0_i32_7 = arith.constant 0 : i32
    %12 = arith.addi %1, %c0_i32_7 : i32
    %c0_8 = arith.constant 0 : index
    %13 = arith.index_cast %12 : i32 to index
    %c1 = arith.constant 1 : index
    %c0_9 = arith.constant 0 : index
    %14 = vector.load %arg3[%c0_8, %13, %c1, %c0_9] : memref<1x17x17x16xbf16, #tpu.memory_space<vmem>>, vector<1x8x16x16xbf16>
    %15 = vector.shape_cast %14 : vector<1x8x16x16xbf16> to vector<8x16x16xbf16>
    %16 = vector.shape_cast %15 : vector<8x16x16xbf16> to vector<128x16xbf16>
    %c0_10 = arith.constant 0 : index
    %c1_11 = arith.constant 1 : index
    %c0_12 = arith.constant 0 : index
    %c0_13 = arith.constant 0 : index
    %17 = vector.load %arg4[%c0_10, %c1_11, %c0_12, %c0_13] : memref<2x2x16x8xbf16, #tpu.memory_space<vmem>>, vector<1x1x16x8xbf16>
    %18 = vector.shape_cast %17 : vector<1x1x16x8xbf16> to vector<16x8xbf16>
    %cst_14 = arith.constant dense<0.000000e+00> : vector<128x8xf32>
    %19 = tpu.matmul %16, %18, %cst_14 {dimension_numbers = #tpu.dot_dimension_numbers<[1], [0], [0], [1], [0, 0, 1, 1], [], []>} : vector<128x16xbf16>, vector<16x8xbf16>, vector<128x8xf32> -> vector<128x8xf32>
    %20 = arith.addf %11, %19 : vector<128x8xf32>
    %c1_i32 = arith.constant 1 : i32
    %21 = arith.addi %1, %c1_i32 : i32
    %c0_15 = arith.constant 0 : index
    %22 = arith.index_cast %21 : i32 to index
    %c0_16 = arith.constant 0 : index
    %c0_17 = arith.constant 0 : index
    %23 = vector.load %arg3[%c0_15, %22, %c0_16, %c0_17] : memref<1x17x17x16xbf16, #tpu.memory_space<vmem>>, vector<1x8x16x16xbf16>
    %24 = vector.shape_cast %23 : vector<1x8x16x16xbf16> to vector<8x16x16xbf16>
    %25 = vector.shape_cast %24 : vector<8x16x16xbf16> to vector<128x16xbf16>
    %c1_18 = arith.constant 1 : index
    %c0_19 = arith.constant 0 : index
    %c0_20 = arith.constant 0 : index
    %c0_21 = arith.constant 0 : index
    %26 = vector.load %arg4[%c1_18, %c0_19, %c0_20, %c0_21] : memref<2x2x16x8xbf16, #tpu.memory_space<vmem>>, vector<1x1x16x8xbf16>
    %27 = vector.shape_cast %26 : vector<1x1x16x8xbf16> to vector<16x8xbf16>
    %cst_22 = arith.constant dense<0.000000e+00> : vector<128x8xf32>
    %28 = tpu.matmul %25, %27, %cst_22 {dimension_numbers = #tpu.dot_dimension_numbers<[1], [0], [0], [1], [0, 0, 1, 1], [], []>} : vector<128x16xbf16>, vector<16x8xbf16>, vector<128x8xf32> -> vector<128x8xf32>
    %29 = arith.addf %20, %28 : vector<128x8xf32>
    %c1_i32_23 = arith.constant 1 : i32
    %30 = arith.addi %1, %c1_i32_23 : i32
    %c0_24 = arith.constant 0 : index
    %31 = arith.index_cast %30 : i32 to index
    %c1_25 = arith.constant 1 : index
    %c0_26 = arith.constant 0 : index
    %32 = vector.load %arg3[%c0_24, %31, %c1_25, %c0_26] : memref<1x17x17x16xbf16, #tpu.memory_space<vmem>>, vector<1x8x16x16xbf16>
    %33 = vector.shape_cast %32 : vector<1x8x16x16xbf16> to vector<8x16x16xbf16>
    %34 = vector.shape_cast %33 : vector<8x16x16xbf16> to vector<128x16xbf16>
    %c1_27 = arith.constant 1 : index
    %c1_28 = arith.constant 1 : index
    %c0_29 = arith.constant 0 : index
    %c0_30 = arith.constant 0 : index
    %35 = vector.load %arg4[%c1_27, %c1_28, %c0_29, %c0_30] : memref<2x2x16x8xbf16, #tpu.memory_space<vmem>>, vector<1x1x16x8xbf16>
    %36 = vector.shape_cast %35 : vector<1x1x16x8xbf16> to vector<16x8xbf16>
    %cst_31 = arith.constant dense<0.000000e+00> : vector<128x8xf32>
    %37 = tpu.matmul %34, %36, %cst_31 {dimension_numbers = #tpu.dot_dimension_numbers<[1], [0], [0], [1], [0, 0, 1, 1], [], []>} : vector<128x16xbf16>, vector<16x8xbf16>, vector<128x8xf32> -> vector<128x8xf32>
    %38 = arith.addf %29, %37 : vector<128x8xf32>
    %c0_32 = arith.constant 0 : index
    %c0_33 = arith.constant 0 : index
    %39 = vector.load %arg5[%c0_32, %c0_33] : memref<1x8xf32, #tpu.memory_space<vmem>>, vector<1x8xf32>
    %40 = vector.broadcast %39 : vector<1x8xf32> to vector<128x8xf32>
    %41 = arith.mulf %38, %40 : vector<128x8xf32>
    %c0_34 = arith.constant 0 : index
    %c0_35 = arith.constant 0 : index
    %42 = vector.load %arg6[%c0_34, %c0_35] : memref<1x8xf32, #tpu.memory_space<vmem>>, vector<1x8xf32>
    %43 = vector.broadcast %42 : vector<1x8xf32> to vector<128x8xf32>
    %44 = arith.addf %41, %43 : vector<128x8xf32>
    %cst_36 = arith.constant 0.000000e+00 : f32
    %45 = vector.broadcast %cst_36 : f32 to vector<128x8xf32>
    %46 = arith.maximumf %44, %45 : vector<128x8xf32>
    %47 = vector.shape_cast %46 : vector<128x8xf32> to vector<8x16x8xf32>
    %48 = arith.truncf %47 : vector<8x16x8xf32> to vector<8x16x8xbf16>
    %c0_37 = arith.constant 0 : index
    %c0_38 = arith.constant 0 : index
    %c0_39 = arith.constant 0 : index
    %c0_40 = arith.constant 0 : index
    %49 = vector.load %arg7[%c0_37, %c0_38, %c0_39, %c0_40] : memref<1x8x16x8xbf16, #tpu.memory_space<vmem>>, vector<1x8x16x8xbf16>
    %50 = vector.shape_cast %49 : vector<1x8x16x8xbf16> to vector<8x16x8xbf16>
    %51 = vector.shape_cast %48 : vector<8x16x8xbf16> to vector<1x8x16x8xbf16>
    tpu.vector_store %arg7[%c0_37, %c0_38, %c0_39, %c0_40], %51 {strides = array<i32>} : memref<1x8x16x8xbf16, #tpu.memory_space<vmem>>, vector<1x8x16x8xbf16>,
    return
  }
  func.func @transform_0(%arg0: i32, %arg1: i32, %arg2: i32) -> (i32, i32, i32, i32) {
    %c0_i32 = arith.constant 0 : i32
    %c0_i32_0 = arith.constant 0 : i32
    %c0_i32_1 = arith.constant 0 : i32
    %c0_i32_2 = arith.constant 0 : i32
    return %arg0, %c0_i32, %c0_i32_0, %c0_i32_1 : i32, i32, i32, i32
  }
  func.func @transform_1(%arg0: i32, %arg1: i32, %arg2: i32) -> (i32, i32, i32, i32) {
    %c0_i32 = arith.constant 0 : i32
    %c0_i32_0 = arith.constant 0 : i32
    %c0_i32_1 = arith.constant 0 : i32
    %c0_i32_2 = arith.constant 0 : i32
    return %c0_i32, %c0_i32_0, %c0_i32_1, %arg2 : i32, i32, i32, i32
  }
  func.func @transform_2(%arg0: i32, %arg1: i32, %arg2: i32) -> (i32, i32) {
    %c0_i32 = arith.constant 0 : i32
    %c0_i32_0 = arith.constant 0 : i32
    return %c0_i32, %arg2 : i32, i32
  }
  func.func @transform_3(%arg0: i32, %arg1: i32, %arg2: i32) -> (i32, i32) {
    %c0_i32 = arith.constant 0 : i32
    %c0_i32_0 = arith.constant 0 : i32
    return %c0_i32, %arg2 : i32, i32
  }
  func.func @transform_4(%arg0: i32, %arg1: i32, %arg2: i32) -> (i32, i32, i32, i32) {
    %c0_i32 = arith.constant 0 : i32
    %c0_i32_0 = arith.constant 0 : i32
    return %arg0, %arg1, %c0_i32, %arg2 : i32, i32, i32, i32
  }
}

</mosaic_0001>

<llo_original>
// kernel: tpu_custom_call.1
$region0: #{tpu_custom_call.1}
  #allocation0 [shape = 'u32[]', space=smem, size = 0x4, offset = 0x4, fixed_abs, tag = 'smem constant byte address 0x4 - core index']
  #allocation1 [shape = 'u32[144,128]{1,0:T(1,128)}', space=vmem, size = 0x12000, scoped, tag = 'internal scratch']
  %s0 = inlined_call_operand.vmem [shape: bf16[2,17,17,16], index: 0, kind: input, shape index: {}]
  %s1 = inlined_call_operand.vmem [shape: bf16[2,2,16,8], index: 1, kind: input, shape index: {}]
  %s2 = inlined_call_operand.vmem [shape: f32[1,8], index: 2, kind: input, shape index: {}]
  %s3 = inlined_call_operand.vmem [shape: f32[1,8], index: 3, kind: input, shape index: {}]
  %s4 = inlined_call_operand.vmem [shape: bf16[2,16,16,8], index: 4, kind: output, shape index: {}]
  %s5 = sld [smem:[#allocation0]]
  $region49: #{tpu_custom_call.1} parent=0
    _
  %s7 = ssub.s32 1, %s5
  %s8 = scalar_select 0, %s7, %s5
  loop: start=0, step=1, limit=6
  $region2: #{tpu_custom_call.1} parent=0 // loop_pre_header
    _
  $region3: #{tpu_custom_call.1} parent=0 // loop_header
    %s10 = sphi 0, %s14
    %p11 = scmp.ge.s32.totalorder %s10, 6
    %s17 = sphi 0, %s36
    %s18 = sphi 0, %s32
    %s19 = sphi 0, %s28
    %s20 = sphi 0, %s17
    %s21 = sphi 0, %s18
    %s22 = sphi 0, %s19
    %s23 = sphi 0, %s20
    %s24 = sphi 0, %s21
    %s25 = sphi 0, %s22
    %s39 = sphi 0, %s41
    %s42 = sphi 0, %s39
    %s43 = sphi 0, %s42
    %s59 = sphi 0, %s43
    %s65 = sphi 0, %s67
    %s68 = sphi 0, %s65
    %s69 = sphi 0, %s68
    %s85 = sphi 0, %s69
    %s91 = sphi 0, %s93
    %s94 = sphi 0, %s91
    %s95 = sphi 0, %s94
    %s111 = sphi 0, %s95
    %s117 = sphi 0, %s119
    %s120 = sphi 0, %s117
    %s121 = sphi 0, %s120
    %s137 = sphi 0, %s121
    %s147 = sphi 0, %s149
    %s150 = sphi 0, %s147
    %s151 = sphi 0, %s150
    %s167 = sphi 0, %s151
  $region4: #{tpu_custom_call.1} parent=0 // loop_header_branch
    %13 = sbr.rel (%p11) target = $region8
  $region5: #{tpu_custom_call.1} parent=0 // loop_body
    %s15 = ssub.s32 %s10, 1
    %s16 = ssub.s32 %s10, 2
    %s26 = sadd.s32 1, %s19
    %p27 = scmp.ge.s32.totalorder %s26, 1
    %s28 = scalar_select %p27, 0, %s26
    %s29 = sadd.s32 1, %s18
    %s30 = scalar_select %p27, %s29, %s18
    %p31 = scmp.ge.s32.totalorder %s30, 2
    %s32 = scalar_select %p31, 0, %s30
    %s33 = sadd.s32 1, %s17
    %s34 = scalar_select %p31, %s33, %s17
    %p35 = scmp.ge.s32.totalorder %s34, 2
    %s36 = scalar_select %p35, 0, %s34
    %s37 = ssub.s32 %s17, %s36
    %p38 = scmp.eq.s32.totalorder %s37, 0
    %s40 = sadd.s32 %s39, 1
    %s41 = scalar_select %p38, %s39, %s40
    %p44 = pneg %p38
    %p45 = scmp.eq.s32.totalorder %s10, 3
    %p46 = por %p44, %p45
    %p47 = scmp.ne.s32.totalorder %s39, %s42
    %p48 = scmp.eq.s32.totalorder %s10, 0
    %p49 = por %p47, %p48
    %p50 = scmp.ne.s32.totalorder %s39, %s42
    %p51 = scmp.eq.s32.totalorder %s15, 3
    %p52 = por %p50, %p51
    %p53 = scmp.ne.s32.totalorder %s42, %s43
    %p54 = scmp.eq.s32.totalorder %s15, 0
    %p55 = por %p53, %p54
    %p56 = scmp.ne.s32.totalorder %s42, %s43
    %p57 = scmp.eq.s32.totalorder %s16, 3
    %p58 = por %p56, %p57
    %p60 = scmp.ne.s32.totalorder %s43, %s59
    %p61 = scmp.eq.s32.totalorder %s16, 0
    %p62 = por %p60, %p61
    %s63 = ssub.s32 %s19, %s28
    %p64 = scmp.eq.s32.totalorder %s63, 0
    %s66 = sadd.s32 %s65, 1
    %s67 = scalar_select %p64, %s65, %s66
    %p70 = pneg %p64
    %p71 = scmp.eq.s32.totalorder %s10, 3
    %p72 = por %p70, %p71
    %p73 = scmp.ne.s32.totalorder %s65, %s68
    %p74 = scmp.eq.s32.totalorder %s10, 0
    %p75 = por %p73, %p74
    %p76 = scmp.ne.s32.totalorder %s65, %s68
    %p77 = scmp.eq.s32.totalorder %s15, 3
    %p78 = por %p76, %p77
    %p79 = scmp.ne.s32.totalorder %s68, %s69
    %p80 = scmp.eq.s32.totalorder %s15, 0
    %p81 = por %p79, %p80
    %p82 = scmp.ne.s32.totalorder %s68, %s69
    %p83 = scmp.eq.s32.totalorder %s16, 3
    %p84 = por %p82, %p83
    %p86 = scmp.ne.s32.totalorder %s69, %s85
    %p87 = scmp.eq.s32.totalorder %s16, 0
    %p88 = por %p86, %p87
    %s89 = ssub.s32 %s19, %s28
    %p90 = scmp.eq.s32.totalorder %s89, 0
    %s92 = sadd.s32 %s91, 1
    %s93 = scalar_select %p90, %s91, %s92
    %p96 = pneg %p90
    %p97 = scmp.eq.s32.totalorder %s10, 3
    %p98 = por %p96, %p97
    %p99 = scmp.ne.s32.totalorder %s91, %s94
    %p100 = scmp.eq.s32.totalorder %s10, 0
    %p101 = por %p99, %p100
    %p102 = scmp.ne.s32.totalorder %s91, %s94
    %p103 = scmp.eq.s32.totalorder %s15, 3
    %p104 = por %p102, %p103
    %p105 = scmp.ne.s32.totalorder %s94, %s95
    %p106 = scmp.eq.s32.totalorder %s15, 0
    %p107 = por %p105, %p106
    %p108 = scmp.ne.s32.totalorder %s94, %s95
    %p109 = scmp.eq.s32.totalorder %s16, 3
    %p110 = por %p108, %p109
    %p112 = scmp.ne.s32.totalorder %s95, %s111
    %p113 = scmp.eq.s32.totalorder %s16, 0
    %p114 = por %p112, %p113
    %s115 = ssub.s32 %s19, %s28
    %p116 = scmp.eq.s32.totalorder %s115, 0
    %s118 = sadd.s32 %s117, 1
    %s119 = scalar_select %p116, %s117, %s118
    %p122 = pneg %p116
    %p123 = scmp.eq.s32.totalorder %s10, 3
    %p124 = por %p122, %p123
    %p125 = scmp.ne.s32.totalorder %s117, %s120
    %p126 = scmp.eq.s32.totalorder %s10, 0
    %p127 = por %p125, %p126
    %p128 = scmp.ne.s32.totalorder %s117, %s120
    %p129 = scmp.eq.s32.totalorder %s15, 3
    %p130 = por %p128, %p129
    %p131 = scmp.ne.s32.totalorder %s120, %s121
    %p132 = scmp.eq.s32.totalorder %s15, 0
    %p133 = por %p131, %p132
    %p134 = scmp.ne.s32.totalorder %s120, %s121
    %p135 = scmp.eq.s32.totalorder %s16, 3
    %p136 = por %p134, %p135
    %p138 = scmp.ne.s32.totalorder %s121, %s137
    %p139 = scmp.eq.s32.totalorder %s16, 0
    %p140 = por %p138, %p139
    %s141 = ssub.s32 %s17, %s36
    %s142 = ssub.s32 %s18, %s32
    %s143 = sor.u32 %s141, %s142
    %s144 = ssub.s32 %s19, %s28
    %s145 = sor.u32 %s143, %s144
    %p146 = scmp.eq.s32.totalorder %s145, 0
    %s148 = sadd.s32 %s147, 1
    %s149 = scalar_select %p146, %s147, %s148
    %p152 = pneg %p146
    %p153 = scmp.eq.s32.totalorder %s10, 3
    %p154 = por %p152, %p153
    %p155 = scmp.ne.s32.totalorder %s147, %s150
    %p156 = scmp.eq.s32.totalorder %s10, 0
    %p157 = por %p155, %p156
    %p158 = scmp.ne.s32.totalorder %s147, %s150
    %p159 = scmp.eq.s32.totalorder %s15, 3
    %p160 = por %p158, %p159
    %p161 = scmp.ne.s32.totalorder %s150, %s151
    %p162 = scmp.eq.s32.totalorder %s15, 0
    %p163 = por %p161, %p162
    %p164 = scmp.ne.s32.totalorder %s150, %s151
    %p165 = scmp.eq.s32.totalorder %s16, 3
    %p166 = por %p164, %p165
    %p168 = scmp.ne.s32.totalorder %s151, %s167
    %p169 = scmp.eq.s32.totalorder %s16, 0
    %p170 = por %p168, %p169
    %p171 = scmp.le.s32.totalorder 1, %s10
    %p172 = scmp.lt.s32.totalorder %s10, 5
    %p173 = pnand %p171, %p172
    %p174 = pneg %p173
    // Predicated region
    $region9: #{tpu_custom_call.1} parent=5 // pred_check
      _
    $region10: #{tpu_custom_call.1} parent=5 // pred_check_branch
      %176 = sbr.rel (%p173) target = $region12
    $region11: #{tpu_custom_call.1} parent=5 // pred_region
      %s177 = ssub.s32 %s10, 1
      // Predicated region
      $region13: #{tpu_custom_call.1} parent=11 // pred_check
        %p178 = pneg %p81
      $region14: #{tpu_custom_call.1} parent=11 // pred_check_branch
        %180 = sbr.rel (%p178) target = $region16
      $region15: #{tpu_custom_call.1} parent=11 // pred_region
        %p181 = scmp.lt.s32.totalorder %s22, 0
        %s182 = scalar_select %p181, %s22, 0
        %s183 = smul.addr %s182, 4
        %s184 = scalar_lea.vmem %s1, %s183
      $region16: #{tpu_custom_call.1} parent=11 // pred_fallthru
        _
      // Predicated region
      $region17: #{tpu_custom_call.1} parent=11 // pred_check
        %p185 = pneg %p107
      $region18: #{tpu_custom_call.1} parent=11 // pred_check_branch
        %187 = sbr.rel (%p185) target = $region20
      $region19: #{tpu_custom_call.1} parent=11 // pred_region
        %p188 = scmp.lt.s32.totalorder %s22, 0
        %s189 = scalar_select %p188, %s22, 0
        %s190 = scalar_lea.vmem %s2, %s189
      $region20: #{tpu_custom_call.1} parent=11 // pred_fallthru
        _
      // Predicated region
      $region21: #{tpu_custom_call.1} parent=11 // pred_check
        %p191 = pneg %p133
      $region22: #{tpu_custom_call.1} parent=11 // pred_check_branch
        %193 = sbr.rel (%p191) target = $region24
      $region23: #{tpu_custom_call.1} parent=11 // pred_region
        %p194 = scmp.lt.s32.totalorder %s22, 0
        %s195 = scalar_select %p194, %s22, 0
        %s196 = scalar_lea.vmem %s3, %s195
      $region24: #{tpu_custom_call.1} parent=11 // pred_fallthru
        _
    $region12: #{tpu_custom_call.1} parent=5 // pred_fallthru
      _
    %p197 = scmp.lt.s32.totalorder %s10, 4
    // Predicated region
    $region25: #{tpu_custom_call.1} parent=5 // pred_check
      %p198 = pneg %p197
    $region26: #{tpu_custom_call.1} parent=5 // pred_check_branch
      %200 = sbr.rel (%p198) target = $region28
    $region27: #{tpu_custom_call.1} parent=5 // pred_region
      // Predicated region
      $region29: #{tpu_custom_call.1} parent=27 // pred_check
        %p201 = pneg %p49
      $region30: #{tpu_custom_call.1} parent=27 // pred_check_branch
        %203 = sbr.rel (%p201) target = $region32
      $region31: #{tpu_custom_call.1} parent=27 // pred_region
        %p204 = scmp.lt.s32.totalorder %s17, 1
        %s205 = scalar_select %p204, %s17, 1
        %s206 = smul.addr %s205, 51
        %s207 = smul.addr %s206, 4
        %s208 = scalar_lea.vmem %s0, %s207
      $region32: #{tpu_custom_call.1} parent=27 // pred_fallthru
        _
    $region28: #{tpu_custom_call.1} parent=5 // pred_fallthru
      _
    %p209 = scmp.le.s32.totalorder 1, %s10
    %p210 = scmp.lt.s32.totalorder %s10, 5
    %p211 = pnand %p209, %p210
    %p212 = pneg %p211
    // Predicated region
    $region33: #{tpu_custom_call.1} parent=5 // pred_check
      _
    $region34: #{tpu_custom_call.1} parent=5 // pred_check_branch
      %214 = sbr.rel (%p211) target = $region36
    $region35: #{tpu_custom_call.1} parent=5 // pred_region
      %s215 = ssub.s32 %s10, 1
      %p216 = scmp.lt.s32.totalorder %s20, 1
      %s217 = scalar_select %p216, %s20, 1
      %s218 = smul.addr %s217, 51
      %s219 = smul.addr %s218, 4
      %s220 = scalar_lea.vmem %s0, %s219
      %p221 = pneg %p55
      %p222 = pneg %p52
      %p223 = scmp.lt.s32.totalorder %s22, 0
      %s224 = scalar_select %p223, %s22, 0
      %s225 = smul.addr %s224, 4
      %s226 = scalar_lea.vmem %s1, %s225
      %p227 = pneg %p81
      %p228 = pneg %p78
      %p229 = scmp.lt.s32.totalorder %s22, 0
      %s230 = scalar_select %p229, %s22, 0
      %s231 = scalar_lea.vmem %s2, %s230
      %p232 = pneg %p107
      %p233 = pneg %p104
      %p234 = scmp.lt.s32.totalorder %s22, 0
      %s235 = scalar_select %p234, %s22, 0
      %s236 = scalar_lea.vmem %s3, %s235
      %p237 = pneg %p133
      %p238 = pneg %p130
      %p239 = pneg %p163
      %p240 = pneg %p160
      %s241 = smul.u32 8, %s21
      %p242 = scmp.lt.s32.totalorder %s20, 1
      %s243 = scalar_select %p242, %s20, 1
      %p244 = scmp.lt.s32.totalorder %s241, 15
      %s245 = scalar_select %p244, %s241, 15
      %p246 = scmp.lt.s32.totalorder %s22, 0
      %s247 = scalar_select %p246, %s22, 0
      %s248 = smul.addr %s245, 2
      %s249 = sadd.s32 %s247, %s248
      %s250 = smul.addr %s243, 32
      %s251 = sadd.s32 %s249, %s250
      %s252 = smul.addr %s251, 4
      %s253 = scalar_lea.vmem %s4, %s252
      %p254 = scmp.lt.s32.totalorder %s20, 1
      %s255 = scalar_select %p254, %s20, 1
      %s256 = smul.addr %s255, 51
      %s257 = smul.addr %s256, 4
      %s258 = scalar_lea.vmem %s0, %s257
      %p259 = scmp.lt.s32.totalorder %s22, 0
      %s260 = scalar_select %p259, %s22, 0
      %s261 = smul.addr %s260, 4
      %s262 = scalar_lea.vmem %s1, %s261
      %p263 = scmp.lt.s32.totalorder %s22, 0
      %s264 = scalar_select %p263, %s22, 0
      %s265 = scalar_lea.vmem %s2, %s264
      %p266 = scmp.lt.s32.totalorder %s22, 0
      %s267 = scalar_select %p266, %s22, 0
      %s268 = scalar_lea.vmem %s3, %s267
      %s269 = smul.u32 8, %s21
      %p270 = scmp.lt.s32.totalorder %s20, 1
      %s271 = scalar_select %p270, %s20, 1
      %p272 = scmp.lt.s32.totalorder %s269, 15
      %s273 = scalar_select %p272, %s269, 15
      %p274 = scmp.lt.s32.totalorder %s22, 0
      %s275 = scalar_select %p274, %s22, 0
      %s276 = smul.addr %s273, 2
      %s277 = sadd.s32 %s275, %s276
      %s278 = smul.addr %s271, 32
      %s279 = sadd.s32 %s277, %s278
      %s280 = smul.addr %s279, 4
      %s281 = scalar_lea.vmem %s4, %s280
      %s282 = smul.u32 8, %s21
      %s284 = smul.u32 %s21, 8
      %s285 = smul.u32 %s284, 3
      %s286 = smul.addr %s285, 4
      %s287 = scalar_lea.vmem %s258, %s286
      %v288 = vld [vmem:[%s287] sm:$0xf]
      %v289 = vld [vmem:[%s287 + $0x4] sm:$0xf]
      %v290 = vld [vmem:[%s287 + $0xc] sm:$0xf]
      %v291 = vld [vmem:[%s287 + $0x10] sm:$0xf]
      %v292 = vld [vmem:[%s287 + $0x18] sm:$0xf]
      %v293 = vld [vmem:[%s287 + $0x1c] sm:$0xf]
      %v294 = vld [vmem:[%s287 + $0x24] sm:$0xf]
      %v295 = vld [vmem:[%s287 + $0x28] sm:$0xf]
      %v296 = vld [vmem:[%s287 + $0x30] sm:$0xf]
      %v297 = vld [vmem:[%s287 + $0x34] sm:$0xf]
      %v298 = vld [vmem:[%s287 + $0x3c] sm:$0xf]
      %v299 = vld [vmem:[%s287 + $0x40] sm:$0xf]
      %v300 = vld [vmem:[%s287 + $0x48] sm:$0xf]
      %v301 = vld [vmem:[%s287 + $0x4c] sm:$0xf]
      %v302 = vld [vmem:[%s287 + $0x54] sm:$0xf]
      %v303 = vld [vmem:[%s287 + $0x58] sm:$0xf]
      %v304 = vld [vmem:[%s262] sm:$0xf]
      %v305 = vld [vmem:[%s262 + $0x4] sm:$0xf]
      %v306 = vld [vmem:[%s287 + $0x8] sm:$0x1]
      %v307 = vld [vmem:[%s287 + $0x14] sm:$0x1]
      %v308 = vld [vmem:[%s287 + $0x20] sm:$0x1]
      %v309 = vld [vmem:[%s287 + $0x2c] sm:$0x1]
      %v310 = vld [vmem:[%s287 + $0x38] sm:$0x1]
      %v311 = vld [vmem:[%s287 + $0x44] sm:$0x1]
      %v312 = vld [vmem:[%s287 + $0x50] sm:$0x1]
      %v313 = vld [vmem:[%s287 + $0x5c] sm:$0x1]
      %vm314 = vsmask.f32 3328
      %vm315 = vsmask.f32 7440
      %vm316 = vmor %vm314, %vm315
      %v318 = vshrl.u32 %v288, 16
      %v320 = vrot.slane %v318, 4
      %v321 = vshll.u32 %v288, 16
      %v323 = vrot.slane %v321, 5
      %v324 = vor.u32 %v320, %v323
      %v325 = vrot.slane %v324, 4
      %v327 = vshll.u32 %v289, 16
      %v329 = vrot.slane %v327, 5
      %v330 = vsel %vm316, %v325, %v329
      %v331 = vshrl.u32 %v289, 16
      %v333 = vrot.slane %v331, 4
      %v334 = vor.u32 %v333, %v329
      %v335 = vrot.slane %v334, 4
      %v337 = vshll.u32 %v306, 16
      %v339 = vrot.slane %v337, 5
      %v340 = vsel %vm316, %v335, %v339
      %v342 = vshrl.u32 %v290, 16
      %v344 = vrot.slane %v342, 4
      %v345 = vshll.u32 %v290, 16
      %v347 = vrot.slane %v345, 5
      %v348 = vor.u32 %v344, %v347
      %v349 = vrot.slane %v348, 4
      %v351 = vshll.u32 %v291, 16
      %v353 = vrot.slane %v351, 5
      %v354 = vsel %vm316, %v349, %v353
      %v355 = vshrl.u32 %v291, 16
      %v357 = vrot.slane %v355, 4
      %v358 = vor.u32 %v357, %v353
      %v359 = vrot.slane %v358, 4
      %v361 = vshll.u32 %v307, 16
      %v363 = vrot.slane %v361, 5
      %v364 = vsel %vm316, %v359, %v363
      %v366 = vshrl.u32 %v292, 16
      %v368 = vrot.slane %v366, 4
      %v369 = vshll.u32 %v292, 16
      %v371 = vrot.slane %v369, 5
      %v372 = vor.u32 %v368, %v371
      %v373 = vrot.slane %v372, 4
      %v375 = vshll.u32 %v293, 16
      %v377 = vrot.slane %v375, 5
      %v378 = vsel %vm316, %v373, %v377
      %v379 = vshrl.u32 %v293, 16
      %v381 = vrot.slane %v379, 4
      %v382 = vor.u32 %v381, %v377
      %v383 = vrot.slane %v382, 4
      %v385 = vshll.u32 %v308, 16
      %v387 = vrot.slane %v385, 5
      %v388 = vsel %vm316, %v383, %v387
      %v390 = vshrl.u32 %v294, 16
      %v392 = vrot.slane %v390, 4
      %v393 = vshll.u32 %v294, 16
      %v395 = vrot.slane %v393, 5
      %v396 = vor.u32 %v392, %v395
      %v397 = vrot.slane %v396, 4
      %v399 = vshll.u32 %v295, 16
      %v401 = vrot.slane %v399, 5
      %v402 = vsel %vm316, %v397, %v401
      %v403 = vshrl.u32 %v295, 16
      %v405 = vrot.slane %v403, 4
      %v406 = vor.u32 %v405, %v401
      %v407 = vrot.slane %v406, 4
      %v409 = vshll.u32 %v309, 16
      %v411 = vrot.slane %v409, 5
      %v412 = vsel %vm316, %v407, %v411
      %v414 = vshrl.u32 %v296, 16
      %v416 = vrot.slane %v414, 4
      %v417 = vshll.u32 %v296, 16
      %v419 = vrot.slane %v417, 5
      %v420 = vor.u32 %v416, %v419
      %v421 = vrot.slane %v420, 4
      %v423 = vshll.u32 %v297, 16
      %v425 = vrot.slane %v423, 5
      %v426 = vsel %vm316, %v421, %v425
      %v427 = vshrl.u32 %v297, 16
      %v429 = vrot.slane %v427, 4
      %v430 = vor.u32 %v429, %v425
      %v431 = vrot.slane %v430, 4
      %v433 = vshll.u32 %v310, 16
      %v435 = vrot.slane %v433, 5
      %v436 = vsel %vm316, %v431, %v435
      %v438 = vshrl.u32 %v298, 16
      %v440 = vrot.slane %v438, 4
      %v441 = vshll.u32 %v298, 16
      %v443 = vrot.slane %v441, 5
      %v444 = vor.u32 %v440, %v443
      %v445 = vrot.slane %v444, 4
      %v447 = vshll.u32 %v299, 16
      %v449 = vrot.slane %v447, 5
      %v450 = vsel %vm316, %v445, %v449
      %v451 = vshrl.u32 %v299, 16
      %v453 = vrot.slane %v451, 4
      %v454 = vor.u32 %v453, %v449
      %v455 = vrot.slane %v454, 4
      %v457 = vshll.u32 %v311, 16
      %v459 = vrot.slane %v457, 5
      %v460 = vsel %vm316, %v455, %v459
      %v462 = vshrl.u32 %v300, 16
      %v464 = vrot.slane %v462, 4
      %v465 = vshll.u32 %v300, 16
      %v467 = vrot.slane %v465, 5
      %v468 = vor.u32 %v464, %v467
      %v469 = vrot.slane %v468, 4
      %v471 = vshll.u32 %v301, 16
      %v473 = vrot.slane %v471, 5
      %v474 = vsel %vm316, %v469, %v473
      %v475 = vshrl.u32 %v301, 16
      %v477 = vrot.slane %v475, 4
      %v478 = vor.u32 %v477, %v473
      %v479 = vrot.slane %v478, 4
      %v481 = vshll.u32 %v312, 16
      %v483 = vrot.slane %v481, 5
      %v484 = vsel %vm316, %v479, %v483
      %v486 = vshrl.u32 %v302, 16
      %v488 = vrot.slane %v486, 4
      %v489 = vshll.u32 %v302, 16
      %v491 = vrot.slane %v489, 5
      %v492 = vor.u32 %v488, %v491
      %v493 = vrot.slane %v492, 4
      %v495 = vshll.u32 %v303, 16
      %v497 = vrot.slane %v495, 5
      %v498 = vsel %vm316, %v493, %v497
      %v499 = vshrl.u32 %v303, 16
      %v501 = vrot.slane %v499, 4
      %v502 = vor.u32 %v501, %v497
      %v503 = vrot.slane %v502, 4
      %v505 = vshll.u32 %v313, 16
      %v507 = vrot.slane %v505, 5
      %v508 = vsel %vm316, %v503, %v507
      %s509 = scalar_lea.vmem %s262, 8
      %v510 = vld [vmem:[%s509] sm:$0xf]
      %v511 = vld [vmem:[%s509 + $0x4] sm:$0xf]
      %v512 = vunpack.c.l.b16 %v330
      %v513 = vunpack.c.l.b16 %v340
      %v514 = vunpack.c.l.b16 %v354
      %v515 = vunpack.c.l.b16 %v364
      %v516 = vunpack.c.l.b16 %v378
      %v517 = vunpack.c.l.b16 %v388
      %v518 = vunpack.c.l.b16 %v402
      %v519 = vunpack.c.l.b16 %v412
      %v520 = vunpack.c.l.b16 %v426
      %v521 = vunpack.c.l.b16 %v436
      %v522 = vunpack.c.l.b16 %v450
      %v523 = vunpack.c.l.b16 %v460
      %v524 = vunpack.c.l.b16 %v474
      %v525 = vunpack.c.l.b16 %v484
      %v526 = vunpack.c.l.b16 %v498
      %v527 = vunpack.c.l.b16 %v508
      %v528 = vpack.c.b16 %v513, %v512
      %v529 = vpack.c.b16 %v515, %v514
      %v530 = vpack.c.b16 %v517, %v516
      %v531 = vpack.c.b16 %v519, %v518
      %v532 = vpack.c.b16 %v521, %v520
      %v533 = vpack.c.b16 %v523, %v522
      %v534 = vpack.c.b16 %v525, %v524
      %v535 = vpack.c.b16 %v527, %v526
      %v538 = vunpack.c.l.b16 %v510
      %v539 = vunpack.c.l.b16 %v511
      %v540 = vpack.c.b16 %v539, %v538
      %vm542 = vcmask 130048
      %v544 = vsel %vm542, %v528, 0
      %v547 = vsel %vm542, %v529, 0
      %v550 = vsel %vm542, %v530, 0
      %v553 = vsel %vm542, %v531, 0
      %v556 = vsel %vm542, %v532, 0
      %v559 = vsel %vm542, %v533, 0
      %v562 = vsel %vm542, %v534, 0
      %v565 = vsel %vm542, %v535, 0
      %567 = vmatprep.subr.bf16.mxu0 0
      %568 = vmatpush1.bf16.msra.mxu0 0
      %569 = vmatprep.subr.bf16.mxu0 0
      %570 = vmatpush1.bf16.msra.mxu0 0
      %571 = vmatprep.subr.bf16.mxu0 0
      %572 = vmatpush1.bf16.msra.mxu0 0
      %573 = vmatprep.subr.bf16.mxu0 0
      %574 = vmatpush1.bf16.msra.mxu0 0
      %575 = vmatprep.subr.bf16.mxu0 0
      %576 = vmatpush1.bf16.msra.mxu0 0
      %577 = vmatprep.subr.bf16.mxu0 0
      %578 = vmatpush1.bf16.msra.mxu0 0
      %579 = vmatprep.subr.bf16.mxu0 0
      %580 = vmatpush1.bf16.msra.mxu0 0
      %581 = vmatprep.subr.bf16.mxu0 0
      %582 = vmatpush1.bf16.msra.mxu0 %v540
      %583 = vmatprep.subr.bf16.mxu0 0
      %584 = vmatpush2.bf16.msra.mxu0 0
      %585 = vmatprep.subr.bf16.mxu0 0
      %586 = vmatpush2.bf16.msra.mxu0 0
      %587 = vmatprep.subr.bf16.mxu0 0
      %588 = vmatpush2.bf16.msra.mxu0 0
      %589 = vmatprep.subr.bf16.mxu0 0
      %590 = vmatpush2.bf16.msra.mxu0 0
      %591 = vmatprep.subr.bf16.mxu0 0
      %592 = vmatpush2.bf16.msra.mxu0 0
      %593 = vmatprep.subr.bf16.mxu0 0
      %594 = vmatpush2.bf16.msra.mxu0 0
      %595 = vmatprep.subr.bf16.mxu0 0
      %596 = vmatpush2.bf16.msra.mxu0 0
      %597 = vmatprep.subr.bf16.mxu0 0
      %598 = vmatpush2.bf16.msra.mxu0 0
      %599 = vmatprep.mubr.bf16.mxu0 0
      %600 = vmatmul.mubr.bf16.gmra.mxu0 %v544
      %v601 = vpop.f32.mrf.mxu0
      %v602 = vadd.f32 0.0, %v601
      %v603 = vpop.f32.mrf.mxu0
      %v604 = vpop.f32.mrf.mxu0
      %v605 = vadd.f32 0.0, %v604
      %v606 = vpop.f32.mrf.mxu0
      %607 = vmatprep.mubr.bf16.mxu0 0
      %608 = vmatmul.mubr.bf16.gmra.mxu0 %v547
      %v609 = vpop.f32.mrf.mxu0
      %v610 = vadd.f32 0.0, %v609
      %v611 = vpop.f32.mrf.mxu0
      %v612 = vpop.f32.mrf.mxu0
      %v613 = vadd.f32 0.0, %v612
      %v614 = vpop.f32.mrf.mxu0
      %615 = vmatprep.mubr.bf16.mxu0 0
      %616 = vmatmul.mubr.bf16.gmra.mxu0 %v550
      %v617 = vpop.f32.mrf.mxu0
      %v618 = vadd.f32 0.0, %v617
      %v619 = vpop.f32.mrf.mxu0
      %v620 = vpop.f32.mrf.mxu0
      %v621 = vadd.f32 0.0, %v620
      %v622 = vpop.f32.mrf.mxu0
      %623 = vmatprep.mubr.bf16.mxu0 0
      %624 = vmatmul.mubr.bf16.gmra.mxu0 %v553
      %v625 = vpop.f32.mrf.mxu0
      %v626 = vadd.f32 0.0, %v625
      %v627 = vpop.f32.mrf.mxu0
      %v628 = vpop.f32.mrf.mxu0
      %v629 = vadd.f32 0.0, %v628
      %v630 = vpop.f32.mrf.mxu0
      %631 = vmatprep.mubr.bf16.mxu0 0
      %632 = vmatmul.mubr.bf16.gmra.mxu0 %v556
      %v633 = vpop.f32.mrf.mxu0
      %v634 = vadd.f32 0.0, %v633
      %v635 = vpop.f32.mrf.mxu0
      %v636 = vpop.f32.mrf.mxu0
      %v637 = vadd.f32 0.0, %v636
      %v638 = vpop.f32.mrf.mxu0
      %639 = vmatprep.mubr.bf16.mxu0 0
      %640 = vmatmul.mubr.bf16.gmra.mxu0 %v559
      %v641 = vpop.f32.mrf.mxu0
      %v642 = vadd.f32 0.0, %v641
      %v643 = vpop.f32.mrf.mxu0
      %v644 = vpop.f32.mrf.mxu0
      %v645 = vadd.f32 0.0, %v644
      %v646 = vpop.f32.mrf.mxu0
      %647 = vmatprep.mubr.bf16.mxu0 0
      %648 = vmatmul.mubr.bf16.gmra.mxu0 %v562
      %v649 = vpop.f32.mrf.mxu0
      %v650 = vadd.f32 0.0, %v649
      %v651 = vpop.f32.mrf.mxu0
      %v652 = vpop.f32.mrf.mxu0
      %v653 = vadd.f32 0.0, %v652
      %v654 = vpop.f32.mrf.mxu0
      %655 = vmatprep.mubr.bf16.mxu0 0
      %656 = vmatmul.mubr.bf16.gmra.mxu0 %v565
      %v657 = vpop.f32.mrf.mxu0
      %v658 = vadd.f32 0.0, %v657
      %v659 = vpop.f32.mrf.mxu0
      %v660 = vpop.f32.mrf.mxu0
      %v661 = vadd.f32 0.0, %v660
      %v662 = vpop.f32.mrf.mxu0
      %663 = vdwg.mxu0
      %v680 = vunpack.c.l.b16 %v288
      %v681 = vunpack.c.l.b16 %v289
      %v682 = vunpack.c.l.b16 %v290
      %v683 = vunpack.c.l.b16 %v291
      %v684 = vunpack.c.l.b16 %v292
      %v685 = vunpack.c.l.b16 %v293
      %v686 = vunpack.c.l.b16 %v294
      %v687 = vunpack.c.l.b16 %v295
      %v688 = vunpack.c.l.b16 %v296
      %v689 = vunpack.c.l.b16 %v297
      %v690 = vunpack.c.l.b16 %v298
      %v691 = vunpack.c.l.b16 %v299
      %v692 = vunpack.c.l.b16 %v300
      %v693 = vunpack.c.l.b16 %v301
      %v694 = vunpack.c.l.b16 %v302
      %v695 = vunpack.c.l.b16 %v303
      %v696 = vpack.c.b16 %v681, %v680
      %v697 = vpack.c.b16 %v683, %v682
      %v698 = vpack.c.b16 %v685, %v684
      %v699 = vpack.c.b16 %v687, %v686
      %v700 = vpack.c.b16 %v689, %v688
      %v701 = vpack.c.b16 %v691, %v690
      %v702 = vpack.c.b16 %v693, %v692
      %v703 = vpack.c.b16 %v695, %v694
      %v706 = vunpack.c.l.b16 %v304
      %v707 = vunpack.c.l.b16 %v305
      %v708 = vpack.c.b16 %v707, %v706
      %v711 = vsel %vm542, %v696, 0
      %v714 = vsel %vm542, %v697, 0
      %v717 = vsel %vm542, %v698, 0
      %v720 = vsel %vm542, %v699, 0
      %v723 = vsel %vm542, %v700, 0
      %v726 = vsel %vm542, %v701, 0
      %v729 = vsel %vm542, %v702, 0
      %v732 = vsel %vm542, %v703, 0
      %734 = vmatprep.subr.bf16.mxu0 0
      %735 = vmatpush1.bf16.msra.mxu0 0
      %736 = vmatprep.subr.bf16.mxu0 0
      %737 = vmatpush1.bf16.msra.mxu0 0
      %738 = vmatprep.subr.bf16.mxu0 0
      %739 = vmatpush1.bf16.msra.mxu0 0
      %740 = vmatprep.subr.bf16.mxu0 0
      %741 = vmatpush1.bf16.msra.mxu0 0
      %742 = vmatprep.subr.bf16.mxu0 0
      %743 = vmatpush1.bf16.msra.mxu0 0
      %744 = vmatprep.subr.bf16.mxu0 0
      %745 = vmatpush1.bf16.msra.mxu0 0
      %746 = vmatprep.subr.bf16.mxu0 0
      %747 = vmatpush1.bf16.msra.mxu0 0
      %748 = vmatprep.subr.bf16.mxu0 0
      %749 = vmatpush1.bf16.msra.mxu0 %v708
      %750 = vmatprep.subr.bf16.mxu0 0
      %751 = vmatpush2.bf16.msra.mxu0 0
      %752 = vmatprep.subr.bf16.mxu0 0
      %753 = vmatpush2.bf16.msra.mxu0 0
      %754 = vmatprep.subr.bf16.mxu0 0
      %755 = vmatpush2.bf16.msra.mxu0 0
      %756 = vmatprep.subr.bf16.mxu0 0
      %757 = vmatpush2.bf16.msra.mxu0 0
      %758 = vmatprep.subr.bf16.mxu0 0
      %759 = vmatpush2.bf16.msra.mxu0 0
      %760 = vmatprep.subr.bf16.mxu0 0
      %761 = vmatpush2.bf16.msra.mxu0 0
      %762 = vmatprep.subr.bf16.mxu0 0
      %763 = vmatpush2.bf16.msra.mxu0 0
      %764 = vmatprep.subr.bf16.mxu0 0
      %765 = vmatpush2.bf16.msra.mxu0 0
      %766 = vmatprep.mubr.bf16.mxu0 0
      %767 = vmatmul.mubr.bf16.gmra.mxu0 %v711
      %v768 = vpop.f32.mrf.mxu0
      %v769 = vadd.f32 %v602, %v768
      %v770 = vpop.f32.mrf.mxu0
      %v771 = vpop.f32.mrf.mxu0
      %v772 = vadd.f32 %v605, %v771
      %v773 = vpop.f32.mrf.mxu0
      %774 = vmatprep.mubr.bf16.mxu0 0
      %775 = vmatmul.mubr.bf16.gmra.mxu0 %v714
      %v776 = vpop.f32.mrf.mxu0
      %v777 = vadd.f32 %v610, %v776
      %v778 = vpop.f32.mrf.mxu0
      %v779 = vpop.f32.mrf.mxu0
      %v780 = vadd.f32 %v613, %v779
      %v781 = vpop.f32.mrf.mxu0
      %782 = vmatprep.mubr.bf16.mxu0 0
      %783 = vmatmul.mubr.bf16.gmra.mxu0 %v717
      %v784 = vpop.f32.mrf.mxu0
      %v785 = vadd.f32 %v618, %v784
      %v786 = vpop.f32.mrf.mxu0
      %v787 = vpop.f32.mrf.mxu0
      %v788 = vadd.f32 %v621, %v787
      %v789 = vpop.f32.mrf.mxu0
      %790 = vmatprep.mubr.bf16.mxu0 0
      %791 = vmatmul.mubr.bf16.gmra.mxu0 %v720
      %v792 = vpop.f32.mrf.mxu0
      %v793 = vadd.f32 %v626, %v792
      %v794 = vpop.f32.mrf.mxu0
      %v795 = vpop.f32.mrf.mxu0
      %v796 = vadd.f32 %v629, %v795
      %v797 = vpop.f32.mrf.mxu0
      %798 = vmatprep.mubr.bf16.mxu0 0
      %799 = vmatmul.mubr.bf16.gmra.mxu0 %v723
      %v800 = vpop.f32.mrf.mxu0
      %v801 = vadd.f32 %v634, %v800
      %v802 = vpop.f32.mrf.mxu0
      %v803 = vpop.f32.mrf.mxu0
      %v804 = vadd.f32 %v637, %v803
      %v805 = vpop.f32.mrf.mxu0
      %806 = vmatprep.mubr.bf16.mxu0 0
      %807 = vmatmul.mubr.bf16.gmra.mxu0 %v726
      %v808 = vpop.f32.mrf.mxu0
      %v809 = vadd.f32 %v642, %v808
      %v810 = vpop.f32.mrf.mxu0
      %v811 = vpop.f32.mrf.mxu0
      %v812 = vadd.f32 %v645, %v811
      %v813 = vpop.f32.mrf.mxu0
      %814 = vmatprep.mubr.bf16.mxu0 0
      %815 = vmatmul.mubr.bf16.gmra.mxu0 %v729
      %v816 = vpop.f32.mrf.mxu0
      %v817 = vadd.f32 %v650, %v816
      %v818 = vpop.f32.mrf.mxu0
      %v819 = vpop.f32.mrf.mxu0
      %v820 = vadd.f32 %v653, %v819
      %v821 = vpop.f32.mrf.mxu0
      %822 = vmatprep.mubr.bf16.mxu0 0
      %823 = vmatmul.mubr.bf16.gmra.mxu0 %v732
      %v824 = vpop.f32.mrf.mxu0
      %v825 = vadd.f32 %v658, %v824
      %v826 = vpop.f32.mrf.mxu0
      %v827 = vpop.f32.mrf.mxu0
      %v828 = vadd.f32 %v661, %v827
      %v829 = vpop.f32.mrf.mxu0
      %830 = vdwg.mxu0
      %s831 = sadd.s32 %s284, 1
      %s832 = smul.u32 %s831, 3
      %s833 = smul.addr %s832, 4
      %s834 = scalar_lea.vmem %s258, %s833
      %v835 = vld [vmem:[%s834] sm:$0xf]
      %v836 = vld [vmem:[%s834 + $0x4] sm:$0xf]
      %v837 = vld [vmem:[%s834 + $0xc] sm:$0xf]
      %v838 = vld [vmem:[%s834 + $0x10] sm:$0xf]
      %v839 = vld [vmem:[%s834 + $0x18] sm:$0xf]
      %v840 = vld [vmem:[%s834 + $0x1c] sm:$0xf]
      %v841 = vld [vmem:[%s834 + $0x24] sm:$0xf]
      %v842 = vld [vmem:[%s834 + $0x28] sm:$0xf]
      %v843 = vld [vmem:[%s834 + $0x30] sm:$0xf]
      %v844 = vld [vmem:[%s834 + $0x34] sm:$0xf]
      %v845 = vld [vmem:[%s834 + $0x3c] sm:$0xf]
      %v846 = vld [vmem:[%s834 + $0x40] sm:$0xf]
      %v847 = vld [vmem:[%s834 + $0x48] sm:$0xf]
      %v848 = vld [vmem:[%s834 + $0x4c] sm:$0xf]
      %v849 = vld [vmem:[%s834 + $0x54] sm:$0xf]
      %v850 = vld [vmem:[%s834 + $0x58] sm:$0xf]
      %s851 = scalar_lea.vmem %s262, 16
      %v852 = vld [vmem:[%s851] sm:$0xf]
      %v853 = vld [vmem:[%s851 + $0x4] sm:$0xf]
      %v870 = vunpack.c.l.b16 %v835
      %v871 = vunpack.c.l.b16 %v836
      %v872 = vunpack.c.l.b16 %v837
      %v873 = vunpack.c.l.b16 %v838
      %v874 = vunpack.c.l.b16 %v839
      %v875 = vunpack.c.l.b16 %v840
      %v876 = vunpack.c.l.b16 %v841
      %v877 = vunpack.c.l.b16 %v842
      %v878 = vunpack.c.l.b16 %v843
      %v879 = vunpack.c.l.b16 %v844
      %v880 = vunpack.c.l.b16 %v845
      %v881 = vunpack.c.l.b16 %v846
      %v882 = vunpack.c.l.b16 %v847
      %v883 = vunpack.c.l.b16 %v848
      %v884 = vunpack.c.l.b16 %v849
      %v885 = vunpack.c.l.b16 %v850
      %v886 = vpack.c.b16 %v871, %v870
      %v887 = vpack.c.b16 %v873, %v872
      %v888 = vpack.c.b16 %v875, %v874
      %v889 = vpack.c.b16 %v877, %v876
      %v890 = vpack.c.b16 %v879, %v878
      %v891 = vpack.c.b16 %v881, %v880
      %v892 = vpack.c.b16 %v883, %v882
      %v893 = vpack.c.b16 %v885, %v884
      %v896 = vunpack.c.l.b16 %v852
      %v897 = vunpack.c.l.b16 %v853
      %v898 = vpack.c.b16 %v897, %v896
      %v901 = vsel %vm542, %v886, 0
      %v904 = vsel %vm542, %v887, 0
      %v907 = vsel %vm542, %v888, 0
      %v910 = vsel %vm542, %v889, 0
      %v913 = vsel %vm542, %v890, 0
      %v916 = vsel %vm542, %v891, 0
      %v919 = vsel %vm542, %v892, 0
      %v922 = vsel %vm542, %v893, 0
      %924 = vmatprep.subr.bf16.mxu0 0
      %925 = vmatpush1.bf16.msra.mxu0 0
      %926 = vmatprep.subr.bf16.mxu0 0
      %927 = vmatpush1.bf16.msra.mxu0 0
      %928 = vmatprep.subr.bf16.mxu0 0
      %929 = vmatpush1.bf16.msra.mxu0 0
      %930 = vmatprep.subr.bf16.mxu0 0
      %931 = vmatpush1.bf16.msra.mxu0 0
      %932 = vmatprep.subr.bf16.mxu0 0
      %933 = vmatpush1.bf16.msra.mxu0 0
      %934 = vmatprep.subr.bf16.mxu0 0
      %935 = vmatpush1.bf16.msra.mxu0 0
      %936 = vmatprep.subr.bf16.mxu0 0
      %937 = vmatpush1.bf16.msra.mxu0 0
      %938 = vmatprep.subr.bf16.mxu0 0
      %939 = vmatpush1.bf16.msra.mxu0 %v898
      %940 = vmatprep.subr.bf16.mxu0 0
      %941 = vmatpush2.bf16.msra.mxu0 0
      %942 = vmatprep.subr.bf16.mxu0 0
      %943 = vmatpush2.bf16.msra.mxu0 0
      %944 = vmatprep.subr.bf16.mxu0 0
      %945 = vmatpush2.bf16.msra.mxu0 0
      %946 = vmatprep.subr.bf16.mxu0 0
      %947 = vmatpush2.bf16.msra.mxu0 0
      %948 = vmatprep.subr.bf16.mxu0 0
      %949 = vmatpush2.bf16.msra.mxu0 0
      %950 = vmatprep.subr.bf16.mxu0 0
      %951 = vmatpush2.bf16.msra.mxu0 0
      %952 = vmatprep.subr.bf16.mxu0 0
      %953 = vmatpush2.bf16.msra.mxu0 0
      %954 = vmatprep.subr.bf16.mxu0 0
      %955 = vmatpush2.bf16.msra.mxu0 0
      %956 = vmatprep.mubr.bf16.mxu0 0
      %957 = vmatmul.mubr.bf16.gmra.mxu0 %v901
      %v958 = vpop.f32.mrf.mxu0
      %v959 = vadd.f32 0.0, %v958
      %v960 = vpop.f32.mrf.mxu0
      %v961 = vpop.f32.mrf.mxu0
      %v962 = vadd.f32 0.0, %v961
      %v963 = vpop.f32.mrf.mxu0
      %964 = vmatprep.mubr.bf16.mxu0 0
      %965 = vmatmul.mubr.bf16.gmra.mxu0 %v904
      %v966 = vpop.f32.mrf.mxu0
      %v967 = vadd.f32 0.0, %v966
      %v968 = vpop.f32.mrf.mxu0
      %v969 = vpop.f32.mrf.mxu0
      %v970 = vadd.f32 0.0, %v969
      %v971 = vpop.f32.mrf.mxu0
      %972 = vmatprep.mubr.bf16.mxu0 0
      %973 = vmatmul.mubr.bf16.gmra.mxu0 %v907
      %v974 = vpop.f32.mrf.mxu0
      %v975 = vadd.f32 0.0, %v974
      %v976 = vpop.f32.mrf.mxu0
      %v977 = vpop.f32.mrf.mxu0
      %v978 = vadd.f32 0.0, %v977
      %v979 = vpop.f32.mrf.mxu0
      %980 = vmatprep.mubr.bf16.mxu0 0
      %981 = vmatmul.mubr.bf16.gmra.mxu0 %v910
      %v982 = vpop.f32.mrf.mxu0
      %v983 = vadd.f32 0.0, %v982
      %v984 = vpop.f32.mrf.mxu0
      %v985 = vpop.f32.mrf.mxu0
      %v986 = vadd.f32 0.0, %v985
      %v987 = vpop.f32.mrf.mxu0
      %988 = vmatprep.mubr.bf16.mxu0 0
      %989 = vmatmul.mubr.bf16.gmra.mxu0 %v913
      %v990 = vpop.f32.mrf.mxu0
      %v991 = vadd.f32 0.0, %v990
      %v992 = vpop.f32.mrf.mxu0
      %v993 = vpop.f32.mrf.mxu0
      %v994 = vadd.f32 0.0, %v993
      %v995 = vpop.f32.mrf.mxu0
      %996 = vmatprep.mubr.bf16.mxu0 0
      %997 = vmatmul.mubr.bf16.gmra.mxu0 %v916
      %v998 = vpop.f32.mrf.mxu0
      %v999 = vadd.f32 0.0, %v998
      %v1000 = vpop.f32.mrf.mxu0
      %v1001 = vpop.f32.mrf.mxu0
      %v1002 = vadd.f32 0.0, %v1001
      %v1003 = vpop.f32.mrf.mxu0
      %1004 = vmatprep.mubr.bf16.mxu0 0
      %1005 = vmatmul.mubr.bf16.gmra.mxu0 %v919
      %v1006 = vpop.f32.mrf.mxu0
      %v1007 = vadd.f32 0.0, %v1006
      %v1008 = vpop.f32.mrf.mxu0
      %v1009 = vpop.f32.mrf.mxu0
      %v1010 = vadd.f32 0.0, %v1009
      %v1011 = vpop.f32.mrf.mxu0
      %1012 = vmatprep.mubr.bf16.mxu0 0
      %1013 = vmatmul.mubr.bf16.gmra.mxu0 %v922
      %v1014 = vpop.f32.mrf.mxu0
      %v1015 = vadd.f32 0.0, %v1014
      %v1016 = vpop.f32.mrf.mxu0
      %v1017 = vpop.f32.mrf.mxu0
      %v1018 = vadd.f32 0.0, %v1017
      %v1019 = vpop.f32.mrf.mxu0
      %1020 = vdwg.mxu0
      %v1021 = vadd.f32 %v769, %v959
      %v1022 = vadd.f32 %v772, %v962
      %v1023 = vadd.f32 %v777, %v967
      %v1024 = vadd.f32 %v780, %v970
      %v1025 = vadd.f32 %v785, %v975
      %v1026 = vadd.f32 %v788, %v978
      %v1027 = vadd.f32 %v793, %v983
      %v1028 = vadd.f32 %v796, %v986
      %v1029 = vadd.f32 %v801, %v991
      %v1030 = vadd.f32 %v804, %v994
      %v1031 = vadd.f32 %v809, %v999
      %v1032 = vadd.f32 %v812, %v1002
      %v1033 = vadd.f32 %v817, %v1007
      %v1034 = vadd.f32 %v820, %v1010
      %v1035 = vadd.f32 %v825, %v1015
      %v1036 = vadd.f32 %v828, %v1018
      %v1037 = vld [vmem:[%s834] sm:$0xf]
      %v1038 = vld [vmem:[%s834 + $0x4] sm:$0xf]
      %v1039 = vld [vmem:[%s834 + $0x8] sm:$0x1]
      %v1040 = vld [vmem:[%s834 + $0xc] sm:$0xf]
      %v1041 = vld [vmem:[%s834 + $0x10] sm:$0xf]
      %v1042 = vld [vmem:[%s834 + $0x14] sm:$0x1]
      %v1043 = vld [vmem:[%s834 + $0x18] sm:$0xf]
      %v1044 = vld [vmem:[%s834 + $0x1c] sm:$0xf]
      %v1045 = vld [vmem:[%s834 + $0x20] sm:$0x1]
      %v1046 = vld [vmem:[%s834 + $0x24] sm:$0xf]
      %v1047 = vld [vmem:[%s834 + $0x28] sm:$0xf]
      %v1048 = vld [vmem:[%s834 + $0x2c] sm:$0x1]
      %v1049 = vld [vmem:[%s834 + $0x30] sm:$0xf]
      %v1050 = vld [vmem:[%s834 + $0x34] sm:$0xf]
      %v1051 = vld [vmem:[%s834 + $0x38] sm:$0x1]
      %v1052 = vld [vmem:[%s834 + $0x3c] sm:$0xf]
      %v1053 = vld [vmem:[%s834 + $0x40] sm:$0xf]
      %v1054 = vld [vmem:[%s834 + $0x44] sm:$0x1]
      %v1055 = vld [vmem:[%s834 + $0x48] sm:$0xf]
      %v1056 = vld [vmem:[%s834 + $0x4c] sm:$0xf]
      %v1057 = vld [vmem:[%s834 + $0x50] sm:$0x1]
      %v1058 = vld [vmem:[%s834 + $0x54] sm:$0xf]
      %v1059 = vld [vmem:[%s834 + $0x58] sm:$0xf]
      %v1060 = vld [vmem:[%s834 + $0x5c] sm:$0x1]
      %v1062 = vshrl.u32 %v1037, 16
      %v1064 = vrot.slane %v1062, 4
      %v1065 = vshll.u32 %v1037, 16
      %v1067 = vrot.slane %v1065, 5
      %v1068 = vor.u32 %v1064, %v1067
      %v1069 = vrot.slane %v1068, 4
      %v1071 = vshll.u32 %v1038, 16
      %v1073 = vrot.slane %v1071, 5
      %v1074 = vsel %vm316, %v1069, %v1073
      %v1075 = vshrl.u32 %v1038, 16
      %v1077 = vrot.slane %v1075, 4
      %v1078 = vor.u32 %v1077, %v1073
      %v1079 = vrot.slane %v1078, 4
      %v1081 = vshll.u32 %v1039, 16
      %v1083 = vrot.slane %v1081, 5
      %v1084 = vsel %vm316, %v1079, %v1083
      %v1086 = vshrl.u32 %v1040, 16
      %v1088 = vrot.slane %v1086, 4
      %v1089 = vshll.u32 %v1040, 16
      %v1091 = vrot.slane %v1089, 5
      %v1092 = vor.u32 %v1088, %v1091
      %v1093 = vrot.slane %v1092, 4
      %v1095 = vshll.u32 %v1041, 16
      %v1097 = vrot.slane %v1095, 5
      %v1098 = vsel %vm316, %v1093, %v1097
      %v1099 = vshrl.u32 %v1041, 16
      %v1101 = vrot.slane %v1099, 4
      %v1102 = vor.u32 %v1101, %v1097
      %v1103 = vrot.slane %v1102, 4
      %v1105 = vshll.u32 %v1042, 16
      %v1107 = vrot.slane %v1105, 5
      %v1108 = vsel %vm316, %v1103, %v1107
      %v1110 = vshrl.u32 %v1043, 16
      %v1112 = vrot.slane %v1110, 4
      %v1113 = vshll.u32 %v1043, 16
      %v1115 = vrot.slane %v1113, 5
      %v1116 = vor.u32 %v1112, %v1115
      %v1117 = vrot.slane %v1116, 4
      %v1119 = vshll.u32 %v1044, 16
      %v1121 = vrot.slane %v1119, 5
      %v1122 = vsel %vm316, %v1117, %v1121
      %v1123 = vshrl.u32 %v1044, 16
      %v1125 = vrot.slane %v1123, 4
      %v1126 = vor.u32 %v1125, %v1121
      %v1127 = vrot.slane %v1126, 4
      %v1129 = vshll.u32 %v1045, 16
      %v1131 = vrot.slane %v1129, 5
      %v1132 = vsel %vm316, %v1127, %v1131
      %v1134 = vshrl.u32 %v1046, 16
      %v1136 = vrot.slane %v1134, 4
      %v1137 = vshll.u32 %v1046, 16
      %v1139 = vrot.slane %v1137, 5
      %v1140 = vor.u32 %v1136, %v1139
      %v1141 = vrot.slane %v1140, 4
      %v1143 = vshll.u32 %v1047, 16
      %v1145 = vrot.slane %v1143, 5
      %v1146 = vsel %vm316, %v1141, %v1145
      %v1147 = vshrl.u32 %v1047, 16
      %v1149 = vrot.slane %v1147, 4
      %v1150 = vor.u32 %v1149, %v1145
      %v1151 = vrot.slane %v1150, 4
      %v1153 = vshll.u32 %v1048, 16
      %v1155 = vrot.slane %v1153, 5
      %v1156 = vsel %vm316, %v1151, %v1155
      %v1158 = vshrl.u32 %v1049, 16
      %v1160 = vrot.slane %v1158, 4
      %v1161 = vshll.u32 %v1049, 16
      %v1163 = vrot.slane %v1161, 5
      %v1164 = vor.u32 %v1160, %v1163
      %v1165 = vrot.slane %v1164, 4
      %v1167 = vshll.u32 %v1050, 16
      %v1169 = vrot.slane %v1167, 5
      %v1170 = vsel %vm316, %v1165, %v1169
      %v1171 = vshrl.u32 %v1050, 16
      %v1173 = vrot.slane %v1171, 4
      %v1174 = vor.u32 %v1173, %v1169
      %v1175 = vrot.slane %v1174, 4
      %v1177 = vshll.u32 %v1051, 16
      %v1179 = vrot.slane %v1177, 5
      %v1180 = vsel %vm316, %v1175, %v1179
      %v1182 = vshrl.u32 %v1052, 16
      %v1184 = vrot.slane %v1182, 4
      %v1185 = vshll.u32 %v1052, 16
      %v1187 = vrot.slane %v1185, 5
      %v1188 = vor.u32 %v1184, %v1187
      %v1189 = vrot.slane %v1188, 4
      %v1191 = vshll.u32 %v1053, 16
      %v1193 = vrot.slane %v1191, 5
      %v1194 = vsel %vm316, %v1189, %v1193
      %v1195 = vshrl.u32 %v1053, 16
      %v1197 = vrot.slane %v1195, 4
      %v1198 = vor.u32 %v1197, %v1193
      %v1199 = vrot.slane %v1198, 4
      %v1201 = vshll.u32 %v1054, 16
      %v1203 = vrot.slane %v1201, 5
      %v1204 = vsel %vm316, %v1199, %v1203
      %v1206 = vshrl.u32 %v1055, 16
      %v1208 = vrot.slane %v1206, 4
      %v1209 = vshll.u32 %v1055, 16
      %v1211 = vrot.slane %v1209, 5
      %v1212 = vor.u32 %v1208, %v1211
      %v1213 = vrot.slane %v1212, 4
      %v1215 = vshll.u32 %v1056, 16
      %v1217 = vrot.slane %v1215, 5
      %v1218 = vsel %vm316, %v1213, %v1217
      %v1219 = vshrl.u32 %v1056, 16
      %v1221 = vrot.slane %v1219, 4
      %v1222 = vor.u32 %v1221, %v1217
      %v1223 = vrot.slane %v1222, 4
      %v1225 = vshll.u32 %v1057, 16
      %v1227 = vrot.slane %v1225, 5
      %v1228 = vsel %vm316, %v1223, %v1227
      %v1230 = vshrl.u32 %v1058, 16
      %v1232 = vrot.slane %v1230, 4
      %v1233 = vshll.u32 %v1058, 16
      %v1235 = vrot.slane %v1233, 5
      %v1236 = vor.u32 %v1232, %v1235
      %v1237 = vrot.slane %v1236, 4
      %v1239 = vshll.u32 %v1059, 16
      %v1241 = vrot.slane %v1239, 5
      %v1242 = vsel %vm316, %v1237, %v1241
      %v1243 = vshrl.u32 %v1059, 16
      %v1245 = vrot.slane %v1243, 4
      %v1246 = vor.u32 %v1245, %v1241
      %v1247 = vrot.slane %v1246, 4
      %v1249 = vshll.u32 %v1060, 16
      %v1251 = vrot.slane %v1249, 5
      %v1252 = vsel %vm316, %v1247, %v1251
      %s1253 = scalar_lea.vmem %s262, 24
      %v1254 = vld [vmem:[%s1253] sm:$0xf]
      %v1255 = vld [vmem:[%s1253 + $0x4] sm:$0xf]
      %v1256 = vunpack.c.l.b16 %v1074
      %v1257 = vunpack.c.l.b16 %v1084
      %v1258 = vunpack.c.l.b16 %v1098
      %v1259 = vunpack.c.l.b16 %v1108
      %v1260 = vunpack.c.l.b16 %v1122
      %v1261 = vunpack.c.l.b16 %v1132
      %v1262 = vunpack.c.l.b16 %v1146
      %v1263 = vunpack.c.l.b16 %v1156
      %v1264 = vunpack.c.l.b16 %v1170
      %v1265 = vunpack.c.l.b16 %v1180
      %v1266 = vunpack.c.l.b16 %v1194
      %v1267 = vunpack.c.l.b16 %v1204
      %v1268 = vunpack.c.l.b16 %v1218
      %v1269 = vunpack.c.l.b16 %v1228
      %v1270 = vunpack.c.l.b16 %v1242
      %v1271 = vunpack.c.l.b16 %v1252
      %v1272 = vpack.c.b16 %v1257, %v1256
      %v1273 = vpack.c.b16 %v1259, %v1258
      %v1274 = vpack.c.b16 %v1261, %v1260
      %v1275 = vpack.c.b16 %v1263, %v1262
      %v1276 = vpack.c.b16 %v1265, %v1264
      %v1277 = vpack.c.b16 %v1267, %v1266
      %v1278 = vpack.c.b16 %v1269, %v1268
      %v1279 = vpack.c.b16 %v1271, %v1270
      %v1282 = vunpack.c.l.b16 %v1254
      %v1283 = vunpack.c.l.b16 %v1255
      %v1284 = vpack.c.b16 %v1283, %v1282
      %v1287 = vsel %vm542, %v1272, 0
      %v1290 = vsel %vm542, %v1273, 0
      %v1293 = vsel %vm542, %v1274, 0
      %v1296 = vsel %vm542, %v1275, 0
      %v1299 = vsel %vm542, %v1276, 0
      %v1302 = vsel %vm542, %v1277, 0
      %v1305 = vsel %vm542, %v1278, 0
      %v1308 = vsel %vm542, %v1279, 0
      %1310 = vmatprep.subr.bf16.mxu0 0
      %1311 = vmatpush1.bf16.msra.mxu0 0
      %1312 = vmatprep.subr.bf16.mxu0 0
      %1313 = vmatpush1.bf16.msra.mxu0 0
      %1314 = vmatprep.subr.bf16.mxu0 0
      %1315 = vmatpush1.bf16.msra.mxu0 0
      %1316 = vmatprep.subr.bf16.mxu0 0
      %1317 = vmatpush1.bf16.msra.mxu0 0
      %1318 = vmatprep.subr.bf16.mxu0 0
      %1319 = vmatpush1.bf16.msra.mxu0 0
      %1320 = vmatprep.subr.bf16.mxu0 0
      %1321 = vmatpush1.bf16.msra.mxu0 0
      %1322 = vmatprep.subr.bf16.mxu0 0
      %1323 = vmatpush1.bf16.msra.mxu0 0
      %1324 = vmatprep.subr.bf16.mxu0 0
      %1325 = vmatpush1.bf16.msra.mxu0 %v1284
      %1326 = vmatprep.subr.bf16.mxu0 0
      %1327 = vmatpush2.bf16.msra.mxu0 0
      %1328 = vmatprep.subr.bf16.mxu0 0
      %1329 = vmatpush2.bf16.msra.mxu0 0
      %1330 = vmatprep.subr.bf16.mxu0 0
      %1331 = vmatpush2.bf16.msra.mxu0 0
      %1332 = vmatprep.subr.bf16.mxu0 0
      %1333 = vmatpush2.bf16.msra.mxu0 0
      %1334 = vmatprep.subr.bf16.mxu0 0
      %1335 = vmatpush2.bf16.msra.mxu0 0
      %1336 = vmatprep.subr.bf16.mxu0 0
      %1337 = vmatpush2.bf16.msra.mxu0 0
      %1338 = vmatprep.subr.bf16.mxu0 0
      %1339 = vmatpush2.bf16.msra.mxu0 0
      %1340 = vmatprep.subr.bf16.mxu0 0
      %1341 = vmatpush2.bf16.msra.mxu0 0
      %1342 = vmatprep.mubr.bf16.mxu0 0
      %1343 = vmatmul.mubr.bf16.gmra.mxu0 %v1287
      %v1344 = vpop.f32.mrf.mxu0
      %v1345 = vadd.f32 0.0, %v1344
      %v1346 = vpop.f32.mrf.mxu0
      %v1347 = vpop.f32.mrf.mxu0
      %v1348 = vadd.f32 0.0, %v1347
      %v1349 = vpop.f32.mrf.mxu0
      %1350 = vmatprep.mubr.bf16.mxu0 0
      %1351 = vmatmul.mubr.bf16.gmra.mxu0 %v1290
      %v1352 = vpop.f32.mrf.mxu0
      %v1353 = vadd.f32 0.0, %v1352
      %v1354 = vpop.f32.mrf.mxu0
      %v1355 = vpop.f32.mrf.mxu0
      %v1356 = vadd.f32 0.0, %v1355
      %v1357 = vpop.f32.mrf.mxu0
      %1358 = vmatprep.mubr.bf16.mxu0 0
      %1359 = vmatmul.mubr.bf16.gmra.mxu0 %v1293
      %v1360 = vpop.f32.mrf.mxu0
      %v1361 = vadd.f32 0.0, %v1360
      %v1362 = vpop.f32.mrf.mxu0
      %v1363 = vpop.f32.mrf.mxu0
      %v1364 = vadd.f32 0.0, %v1363
      %v1365 = vpop.f32.mrf.mxu0
      %1366 = vmatprep.mubr.bf16.mxu0 0
      %1367 = vmatmul.mubr.bf16.gmra.mxu0 %v1296
      %v1368 = vpop.f32.mrf.mxu0
      %v1369 = vadd.f32 0.0, %v1368
      %v1370 = vpop.f32.mrf.mxu0
      %v1371 = vpop.f32.mrf.mxu0
      %v1372 = vadd.f32 0.0, %v1371
      %v1373 = vpop.f32.mrf.mxu0
      %1374 = vmatprep.mubr.bf16.mxu0 0
      %1375 = vmatmul.mubr.bf16.gmra.mxu0 %v1299
      %v1376 = vpop.f32.mrf.mxu0
      %v1377 = vadd.f32 0.0, %v1376
      %v1378 = vpop.f32.mrf.mxu0
      %v1379 = vpop.f32.mrf.mxu0
      %v1380 = vadd.f32 0.0, %v1379
      %v1381 = vpop.f32.mrf.mxu0
      %1382 = vmatprep.mubr.bf16.mxu0 0
      %1383 = vmatmul.mubr.bf16.gmra.mxu0 %v1302
      %v1384 = vpop.f32.mrf.mxu0
      %v1385 = vadd.f32 0.0, %v1384
      %v1386 = vpop.f32.mrf.mxu0
      %v1387 = vpop.f32.mrf.mxu0
      %v1388 = vadd.f32 0.0, %v1387
      %v1389 = vpop.f32.mrf.mxu0
      %1390 = vmatprep.mubr.bf16.mxu0 0
      %1391 = vmatmul.mubr.bf16.gmra.mxu0 %v1305
      %v1392 = vpop.f32.mrf.mxu0
      %v1393 = vadd.f32 0.0, %v1392
      %v1394 = vpop.f32.mrf.mxu0
      %v1395 = vpop.f32.mrf.mxu0
      %v1396 = vadd.f32 0.0, %v1395
      %v1397 = vpop.f32.mrf.mxu0
      %1398 = vmatprep.mubr.bf16.mxu0 0
      %1399 = vmatmul.mubr.bf16.gmra.mxu0 %v1308
      %v1400 = vpop.f32.mrf.mxu0
      %v1401 = vadd.f32 0.0, %v1400
      %v1402 = vpop.f32.mrf.mxu0
      %v1403 = vpop.f32.mrf.mxu0
      %v1404 = vadd.f32 0.0, %v1403
      %v1405 = vpop.f32.mrf.mxu0
      %1406 = vdwg.mxu0
      %v1407 = vadd.f32 %v1021, %v1345
      %v1408 = vadd.f32 %v1022, %v1348
      %v1409 = vadd.f32 %v1023, %v1353
      %v1410 = vadd.f32 %v1024, %v1356
      %v1411 = vadd.f32 %v1025, %v1361
      %v1412 = vadd.f32 %v1026, %v1364
      %v1413 = vadd.f32 %v1027, %v1369
      %v1414 = vadd.f32 %v1028, %v1372
      %v1415 = vadd.f32 %v1029, %v1377
      %v1416 = vadd.f32 %v1030, %v1380
      %v1417 = vadd.f32 %v1031, %v1385
      %v1418 = vadd.f32 %v1032, %v1388
      %v1419 = vadd.f32 %v1033, %v1393
      %v1420 = vadd.f32 %v1034, %v1396
      %v1421 = vadd.f32 %v1035, %v1401
      %v1422 = vadd.f32 %v1036, %v1404
      %v1423 = vld [vmem:[%s265] sm:$0x1]
      %v1425 = vlaneseq
      %v1426 = vshrl.u32 %v1425, 7
      %v1427 = vsub.s32 0, %v1426
      %v1428 = vrot.slane %v1423, %v1427
      %v1430 = vmul.f32 %v1407, %v1428
      %v1431 = vmul.f32 %v1408, %v1428
      %v1432 = vmul.f32 %v1409, %v1428
      %v1433 = vmul.f32 %v1410, %v1428
      %v1434 = vmul.f32 %v1411, %v1428
      %v1435 = vmul.f32 %v1412, %v1428
      %v1436 = vmul.f32 %v1413, %v1428
      %v1437 = vmul.f32 %v1414, %v1428
      %v1438 = vmul.f32 %v1415, %v1428
      %v1439 = vmul.f32 %v1416, %v1428
      %v1440 = vmul.f32 %v1417, %v1428
      %v1441 = vmul.f32 %v1418, %v1428
      %v1442 = vmul.f32 %v1419, %v1428
      %v1443 = vmul.f32 %v1420, %v1428
      %v1444 = vmul.f32 %v1421, %v1428
      %v1445 = vmul.f32 %v1422, %v1428
      %v1446 = vld [vmem:[%s268] sm:$0x1]
      %v1448 = vlaneseq
      %v1449 = vshrl.u32 %v1448, 7
      %v1450 = vsub.s32 0, %v1449
      %v1451 = vrot.slane %v1446, %v1450
      %v1453 = vadd.f32 %v1430, %v1451
      %v1454 = vadd.f32 %v1431, %v1451
      %v1455 = vadd.f32 %v1432, %v1451
      %v1456 = vadd.f32 %v1433, %v1451
      %v1457 = vadd.f32 %v1434, %v1451
      %v1458 = vadd.f32 %v1435, %v1451
      %v1459 = vadd.f32 %v1436, %v1451
      %v1460 = vadd.f32 %v1437, %v1451
      %v1461 = vadd.f32 %v1438, %v1451
      %v1462 = vadd.f32 %v1439, %v1451
      %v1463 = vadd.f32 %v1440, %v1451
      %v1464 = vadd.f32 %v1441, %v1451
      %v1465 = vadd.f32 %v1442, %v1451
      %v1466 = vadd.f32 %v1443, %v1451
      %v1467 = vadd.f32 %v1444, %v1451
      %v1468 = vadd.f32 %v1445, %v1451
      %v1469 = vmax.f32 %v1453, 0.0
      %v1470 = vmax.f32 %v1454, 0.0
      %v1471 = vmax.f32 %v1455, 0.0
      %v1472 = vmax.f32 %v1456, 0.0
      %v1473 = vmax.f32 %v1457, 0.0
      %v1474 = vmax.f32 %v1458, 0.0
      %v1475 = vmax.f32 %v1459, 0.0
      %v1476 = vmax.f32 %v1460, 0.0
      %v1477 = vmax.f32 %v1461, 0.0
      %v1478 = vmax.f32 %v1462, 0.0
      %v1479 = vmax.f32 %v1463, 0.0
      %v1480 = vmax.f32 %v1464, 0.0
      %v1481 = vmax.f32 %v1465, 0.0
      %v1482 = vmax.f32 %v1466, 0.0
      %v1483 = vmax.f32 %v1467, 0.0
      %v1484 = vmax.f32 %v1468, 0.0
      %v1485 = vpack.c.bf16 %v1470, %v1469
      %v1486 = vpack.c.bf16 %v1472, %v1471
      %v1487 = vpack.c.bf16 %v1474, %v1473
      %v1488 = vpack.c.bf16 %v1476, %v1475
      %v1489 = vpack.c.bf16 %v1478, %v1477
      %v1490 = vpack.c.bf16 %v1480, %v1479
      %v1491 = vpack.c.bf16 %v1482, %v1481
      %v1492 = vpack.c.bf16 %v1484, %v1483
      %v1501 = vunpack.c.l.b16 %v1485
      %v1502 = vunpack.c.h.b16 %v1485
      %v1503 = vunpack.c.l.b16 %v1486
      %v1504 = vunpack.c.h.b16 %v1486
      %v1505 = vunpack.c.l.b16 %v1487
      %v1506 = vunpack.c.h.b16 %v1487
      %v1507 = vunpack.c.l.b16 %v1488
      %v1508 = vunpack.c.h.b16 %v1488
      %v1509 = vunpack.c.l.b16 %v1489
      %v1510 = vunpack.c.h.b16 %v1489
      %v1511 = vunpack.c.l.b16 %v1490
      %v1512 = vunpack.c.h.b16 %v1490
      %v1513 = vunpack.c.l.b16 %v1491
      %v1514 = vunpack.c.h.b16 %v1491
      %v1515 = vunpack.c.l.b16 %v1492
      %v1516 = vunpack.c.h.b16 %v1492
      %v1517 = vpack.c.b16 %v1501, %v1501
      %v1518 = vpack.c.b16 %v1502, %v1502
      %v1519 = vpack.c.b16 %v1503, %v1503
      %v1520 = vpack.c.b16 %v1504, %v1504
      %v1521 = vpack.c.b16 %v1505, %v1505
      %v1522 = vpack.c.b16 %v1506, %v1506
      %v1523 = vpack.c.b16 %v1507, %v1507
      %v1524 = vpack.c.b16 %v1508, %v1508
      %v1525 = vpack.c.b16 %v1509, %v1509
      %v1526 = vpack.c.b16 %v1510, %v1510
      %v1527 = vpack.c.b16 %v1511, %v1511
      %v1528 = vpack.c.b16 %v1512, %v1512
      %v1529 = vpack.c.b16 %v1513, %v1513
      %v1530 = vpack.c.b16 %v1514, %v1514
      %v1531 = vpack.c.b16 %v1515, %v1515
      %v1532 = vpack.c.b16 %v1516, %v1516
      %vm1549 = vcmask 60416
      %1550 = vst.msk [vmem:[%s281] sm:$0xf] %vm1549, %v1517
      %1551 = vst.msk [vmem:[%s281 + $0x4] sm:$0xf] %vm1549, %v1518
      %1552 = vst.msk [vmem:[%s281 + $0x8] sm:$0xf] %vm1549, %v1519
      %1553 = vst.msk [vmem:[%s281 + $0xc] sm:$0xf] %vm1549, %v1520
      %1554 = vst.msk [vmem:[%s281 + $0x10] sm:$0xf] %vm1549, %v1521
      %1555 = vst.msk [vmem:[%s281 + $0x14] sm:$0xf] %vm1549, %v1522
      %1556 = vst.msk [vmem:[%s281 + $0x18] sm:$0xf] %vm1549, %v1523
      %1557 = vst.msk [vmem:[%s281 + $0x1c] sm:$0xf] %vm1549, %v1524
      %1558 = vst.msk [vmem:[%s281 + $0x20] sm:$0xf] %vm1549, %v1525
      %1559 = vst.msk [vmem:[%s281 + $0x24] sm:$0xf] %vm1549, %v1526
      %1560 = vst.msk [vmem:[%s281 + $0x28] sm:$0xf] %vm1549, %v1527
      %1561 = vst.msk [vmem:[%s281 + $0x2c] sm:$0xf] %vm1549, %v1528
      %1562 = vst.msk [vmem:[%s281 + $0x30] sm:$0xf] %vm1549, %v1529
      %1563 = vst.msk [vmem:[%s281 + $0x34] sm:$0xf] %vm1549, %v1530
      %1564 = vst.msk [vmem:[%s281 + $0x38] sm:$0xf] %vm1549, %v1531
      %1565 = vst.msk [vmem:[%s281 + $0x3c] sm:$0xf] %vm1549, %v1532
      %s1566 = smul.u32 8, %s21
      %p1567 = scmp.lt.s32.totalorder %s20, 1
      %s1568 = scalar_select %p1567, %s20, 1
      %p1569 = scmp.lt.s32.totalorder %s1566, 15
      %s1570 = scalar_select %p1569, %s1566, 15
      %p1571 = scmp.lt.s32.totalorder %s22, 0
      %s1572 = scalar_select %p1571, %s22, 0
      %s1573 = smul.addr %s1570, 2
      %s1574 = sadd.s32 %s1572, %s1573
      %s1575 = smul.addr %s1568, 32
      %s1576 = sadd.s32 %s1574, %s1575
      %s1577 = smul.addr %s1576, 4
      %s1578 = scalar_lea.vmem %s4, %s1577
      // Predicated region
      $region37: #{tpu_custom_call.1} parent=35 // pred_check
        %p1579 = pneg %p160
      $region38: #{tpu_custom_call.1} parent=35 // pred_check_branch
        %1581 = sbr.rel (%p1579) target = $region40
      $region39: #{tpu_custom_call.1} parent=35 // pred_region
        %s1582 = smul.u32 8, %s21
      $region40: #{tpu_custom_call.1} parent=35 // pred_fallthru
        _
    $region36: #{tpu_custom_call.1} parent=5 // pred_fallthru
      _
    %p1583 = scmp.le.s32.totalorder 2, %s10
    // Predicated region
    $region41: #{tpu_custom_call.1} parent=5 // pred_check
      %p1584 = pneg %p1583
    $region42: #{tpu_custom_call.1} parent=5 // pred_check_branch
      %1586 = sbr.rel (%p1584) target = $region44
    $region43: #{tpu_custom_call.1} parent=5 // pred_region
      %s1587 = ssub.s32 %s10, 2
      // Predicated region
      $region45: #{tpu_custom_call.1} parent=43 // pred_check
        %p1588 = pneg %p166
      $region46: #{tpu_custom_call.1} parent=43 // pred_check_branch
        %1590 = sbr.rel (%p1588) target = $region48
      $region47: #{tpu_custom_call.1} parent=43 // pred_region
        %s1591 = smul.u32 8, %s24
        %p1592 = scmp.lt.s32.totalorder %s23, 1
        %s1593 = scalar_select %p1592, %s23, 1
        %p1594 = scmp.lt.s32.totalorder %s1591, 15
        %s1595 = scalar_select %p1594, %s1591, 15
        %p1596 = scmp.lt.s32.totalorder %s25, 0
        %s1597 = scalar_select %p1596, %s25, 0
        %s1598 = smul.addr %s1595, 2
        %s1599 = sadd.s32 %s1597, %s1598
        %s1600 = smul.addr %s1593, 32
        %s1601 = sadd.s32 %s1599, %s1600
        %s1602 = smul.addr %s1601, 4
        %s1603 = scalar_lea.vmem %s4, %s1602
      $region48: #{tpu_custom_call.1} parent=43 // pred_fallthru
        _
    $region44: #{tpu_custom_call.1} parent=5 // pred_fallthru
      _
  $region6: #{tpu_custom_call.1} parent=0 // loop_footer
    %s14 = sadd.s32 1, %s10
  $region7: #{tpu_custom_call.1} parent=0 // loop_footer_branch
    %9 = sbr.rel target = $region3
  $region8: #{tpu_custom_call.1} parent=0 // loop_exit
    _

</llo_original>
